<compile_context>
chip_gen: v5e
topology: v5e:2x2
jax: 0.10.0
libtpu: 0.0.40
codegen_flags: <defaults>
</compile_context>

<pallas_src>
import jax
import jax.numpy as jnp
from jax.experimental import pallas as pl
from jax.experimental.pallas import tpu as pltpu


def _round_up(n, m):
    return (n + m - 1) // m * m


def critic_mlp_kernel(x_ref, w1_ref, b1_ref, w2_ref, b2_ref, w3_ref, b3_ref, o_ref):
    # x_ref: (In, TB) -- batch on the lane axis.  w1/w2 in (out_features, in_features).
    x = x_ref[...]
    # fc1 + ReLU (MXU, f32 accumulation)
    h1 = jnp.dot(w1_ref[...], x, preferred_element_type=jnp.float32)   # (H, TB)
    h1 = jnp.maximum(h1 + b1_ref[...], 0.0)
    # fc2 + ReLU
    h2 = jnp.dot(w2_ref[...], h1, preferred_element_type=jnp.float32)  # (H, TB)
    h2 = jnp.maximum(h2 + b2_ref[...], 0.0)
    # fc3: output_size is tiny (1 for a critic) -> skip the N=1 MXU pass.
    # VPU broadcast-multiply + sublane reduce; result is a lane-dense (out, TB) slab.
    w3 = w3_ref[...]                                                    # (H, out)
    out_size = o_ref.shape[0]
    rows = []
    for o in range(out_size):                                           # static loop (out_size is tiny)
        col = w3[:, o:o + 1]                                            # (H, 1)
        rows.append(jnp.sum(col * h2, axis=0, keepdims=True))           # (1, TB)
    out = rows[0] if out_size == 1 else jnp.concatenate(rows, axis=0)   # (out, TB)
    o_ref[...] = out + b3_ref[...]


def critic_forward(x, params):
    """x: (B, input_size) float32.

    params: w1 (H, In), w2 (H, H) in PyTorch (out_features, in_features) layout;
            w3 stored transposed as (H, out); biases b* as (out_features, 1).
    Returns (B, output_size) float32.
    """
    w1, b1 = params["w1"], params["b1"]
    w2, b2 = params["w2"], params["b2"]
    w3, b3 = params["w3"], params["b3"]

    B, in_size = x.shape
    H = w1.shape[0]
    out_size = w3.shape[1]

    # Lane-dense transposed layout: features on sublanes, batch on 128-wide lanes.
    x_t = x.astype(jnp.float32).T                       # (In, B)
    tb = min(_round_up(B, 128), 512)                    # adaptive batch tile
    B_pad = _round_up(B, tb)
    if B_pad != B:
        x_t = jnp.pad(x_t, ((0, 0), (0, B_pad - B)))    # pad batch; sliced off below

    const = lambda i: (0, 0)                            # weights stay VMEM-resident
    out_t = pl.pallas_call(
        critic_mlp_kernel,
        out_shape=jax.ShapeDtypeStruct((out_size, B_pad), jnp.float32),
        grid=(B_pad // tb,),
        in_specs=[
            pl.BlockSpec((in_size, tb), lambda i: (0, i)),   # x tiles stream
            pl.BlockSpec((H, in_size), const),
            pl.BlockSpec((H, 1), const),
            pl.BlockSpec((H, H), const),
            pl.BlockSpec((H, 1), const),
            pl.BlockSpec((H, out_size), const),
            pl.BlockSpec((out_size, 1), const),
        ],
        out_specs=pl.BlockSpec((out_size, tb), lambda i: (0, i)),
        compiler_params=pltpu.CompilerParams(
            dimension_semantics=("parallel",)),              # megacore / v7x dual-TC
        cost_estimate=pl.CostEstimate(
            flops=int(2 * B_pad * (in_size * H + H * H + H * out_size)),
            transcendentals=0,
            bytes_accessed=int(4 * (x_t.size + w1.size + b1.size + w2.size
                                    + b2.size + w3.size + b3.size
                                    + out_size * B_pad)),
        ),
    )(x_t, w1, b1, w2, b2, w3, b3)

    return out_t[:, :B].T                                    # (B, out_size)


def init_params(key, input_size, hidden_size, output_size):
    """Deterministic init mimicking nn.Linear (uniform +/- 1/sqrt(fan_in))."""
    ks = jax.random.split(key, 6)

    def linear(kw, kb, fan_in, fan_out):
        bound = float(fan_in) ** -0.5
        w = jax.random.uniform(kw, (fan_out, fan_in), jnp.float32, -bound, bound)
        b = jax.random.uniform(kb, (fan_out, 1), jnp.float32, -bound, bound)
        return w, b

    w1, b1 = linear(ks[0], ks[1], input_size, hidden_size)
    w2, b2 = linear(ks[2], ks[3], hidden_size, hidden_size)
    w3, b3 = linear(ks[4], ks[5], hidden_size, output_size)
    # fc3 weight stored transposed (in, out): kernel reads lane-aligned columns.
    return {"w1": w1, "b1": b1, "w2": w2, "b2": b2, "w3": w3.T, "b3": b3}


def _reference(x, params):
    ref = jnp.maximum(x @ params["w1"].T + params["b1"].T, 0.0)
    ref = jnp.maximum(ref @ params["w2"].T + params["b2"].T, 0.0)
    return ref @ params["w3"] + params["b3"].T


if __name__ == "__main__":
    key = jax.random.PRNGKey(0)
    k_x, k_x2, k_x3, k_p = jax.random.split(key, 4)

    input_size = 16
    hidden_size = 32
    output_size = 1
    params = init_params(k_p, input_size, hidden_size, output_size)

    # Small batch (pads 8 -> 128, single grid step).
    x = jax.random.normal(k_x, (8, input_size), dtype=jnp.float32)
    out = critic_forward(x, params)
    jax.block_until_ready(out)
    assert out.shape == (8, output_size)
    assert jnp.allclose(out, _reference(x, params), atol=1e-4, rtol=1e-4), "mismatch (B=8)"

    # Ragged batch (pads 300 -> 384, single 384-wide tile).
    x2 = jax.random.normal(k_x2, (300, input_size), dtype=jnp.float32)
    out2 = critic_forward(x2, params)
    jax.block_until_ready(out2)
    assert out2.shape == (300, output_size)
    assert jnp.allclose(out2, _reference(x2, params), atol=1e-4, rtol=1e-4), "mismatch (B=300)"

    # Larger batch (pads 1300 -> 1536, tile=512, grid of 3 -> exercises streaming).
    x3 = jax.random.normal(k_x3, (1300, input_size), dtype=jnp.float32)
    out3 = critic_forward(x3, params)
    jax.block_until_ready(out3)
    assert out3.shape == (1300, output_size)
    assert jnp.allclose(out3, _reference(x3, params), atol=1e-4, rtol=1e-4), "mismatch (B=1300)"

    print("KERNEL_OK")
</pallas_src>

<mosaic_0001>
module attributes {stable_mosaic.version = 11 : i64} {
  func.func @critic_mlp_kernel(%arg0: i32, %arg1: memref<16x128xf32, #tpu.memory_space<vmem>>, %arg2: memref<32x16xf32, #tpu.memory_space<vmem>>, %arg3: memref<32x1xf32, #tpu.memory_space<vmem>>, %arg4: memref<32x32xf32, #tpu.memory_space<vmem>>, %arg5: memref<32x1xf32, #tpu.memory_space<vmem>>, %arg6: memref<32x1xf32, #tpu.memory_space<vmem>>, %arg7: memref<1x1xf32, #tpu.memory_space<vmem>>, %arg8: memref<1x128xf32, #tpu.memory_space<vmem>>) attributes {dimension_semantics = [#tpu.dimension_semantics<parallel>], iteration_bounds = array<i64: 1>, scalar_prefetch = 0 : i64, scratch_operands = 0 : i64, tpu.core_type = #tpu.core_type<tc>, window_params = [{transform_indices = @transform_0, window_bounds = array<i64: 16, 128>}, {pipeline_mode = #tpu.pipeline_mode<synchronous>, transform_indices = @transform_1, window_bounds = array<i64: 32, 16>}, {pipeline_mode = #tpu.pipeline_mode<synchronous>, transform_indices = @transform_2, window_bounds = array<i64: 32, 1>}, {pipeline_mode = #tpu.pipeline_mode<synchronous>, transform_indices = @transform_3, window_bounds = array<i64: 32, 32>}, {pipeline_mode = #tpu.pipeline_mode<synchronous>, transform_indices = @transform_4, window_bounds = array<i64: 32, 1>}, {pipeline_mode = #tpu.pipeline_mode<synchronous>, transform_indices = @transform_5, window_bounds = array<i64: 32, 1>}, {pipeline_mode = #tpu.pipeline_mode<synchronous>, transform_indices = @transform_6, window_bounds = array<i64: 1, 1>}, {transform_indices = @transform_7, window_bounds = array<i64: 1, 128>}]} {
    %c0 = arith.constant 0 : index
    %c0_0 = arith.constant 0 : index
    %0 = vector.load %arg1[%c0, %c0_0] : memref<16x128xf32, #tpu.memory_space<vmem>>, vector<16x128xf32>
    %c0_1 = arith.constant 0 : index
    %c0_2 = arith.constant 0 : index
    %1 = vector.load %arg2[%c0_1, %c0_2] : memref<32x16xf32, #tpu.memory_space<vmem>>, vector<32x16xf32>
    %cst = arith.constant dense<0.000000e+00> : vector<32x128xf32>
    %2 = tpu.matmul %1, %0, %cst {dimension_numbers = #tpu.dot_dimension_numbers<[1], [0], [0], [1], [0, 0, 1, 1], [], []>} : vector<32x16xf32>, vector<16x128xf32>, vector<32x128xf32> -> vector<32x128xf32>
    %c0_3 = arith.constant 0 : index
    %c0_4 = arith.constant 0 : index
    %3 = vector.load %arg3[%c0_3, %c0_4] : memref<32x1xf32, #tpu.memory_space<vmem>>, vector<32x1xf32>
    %4 = vector.broadcast %3 : vector<32x1xf32> to vector<32x128xf32>
    %5 = arith.addf %2, %4 : vector<32x128xf32>
    %cst_5 = arith.constant 0.000000e+00 : f32
    %6 = vector.broadcast %cst_5 : f32 to vector<32x128xf32>
    %7 = arith.maximumf %5, %6 : vector<32x128xf32>
    %c0_6 = arith.constant 0 : index
    %c0_7 = arith.constant 0 : index
    %8 = vector.load %arg4[%c0_6, %c0_7] : memref<32x32xf32, #tpu.memory_space<vmem>>, vector<32x32xf32>
    %cst_8 = arith.constant dense<0.000000e+00> : vector<32x128xf32>
    %9 = tpu.matmul %8, %7, %cst_8 {dimension_numbers = #tpu.dot_dimension_numbers<[1], [0], [0], [1], [0, 0, 1, 1], [], []>} : vector<32x32xf32>, vector<32x128xf32>, vector<32x128xf32> -> vector<32x128xf32>
    %c0_9 = arith.constant 0 : index
    %c0_10 = arith.constant 0 : index
    %10 = vector.load %arg5[%c0_9, %c0_10] : memref<32x1xf32, #tpu.memory_space<vmem>>, vector<32x1xf32>
    %11 = vector.broadcast %10 : vector<32x1xf32> to vector<32x128xf32>
    %12 = arith.addf %9, %11 : vector<32x128xf32>
    %cst_11 = arith.constant 0.000000e+00 : f32
    %13 = vector.broadcast %cst_11 : f32 to vector<32x128xf32>
    %14 = arith.maximumf %12, %13 : vector<32x128xf32>
    %c0_12 = arith.constant 0 : index
    %c0_13 = arith.constant 0 : index
    %15 = vector.load %arg6[%c0_12, %c0_13] : memref<32x1xf32, #tpu.memory_space<vmem>>, vector<32x1xf32>
    %16 = vector.broadcast %15 : vector<32x1xf32> to vector<32x128xf32>
    %17 = arith.mulf %16, %14 : vector<32x128xf32>
    %cst_14 = arith.constant dense<0.000000e+00> : vector<128xf32>
    %18 = vector.multi_reduction <add>, %17, %cst_14 [0] : vector<32x128xf32> to vector<128xf32>
    %19 = vector.shape_cast %18 : vector<128xf32> to vector<1x128xf32>
    %c0_15 = arith.constant 0 : index
    %c0_16 = arith.constant 0 : index
    %20 = vector.load %arg7[%c0_15, %c0_16] : memref<1x1xf32, #tpu.memory_space<vmem>>, vector<1x1xf32>
    %21 = vector.broadcast %20 : vector<1x1xf32> to vector<1x128xf32>
    %22 = arith.addf %19, %21 : vector<1x128xf32>
    %c0_17 = arith.constant 0 : index
    %c0_18 = arith.constant 0 : index
    %23 = vector.load %arg8[%c0_17, %c0_18] : memref<1x128xf32, #tpu.memory_space<vmem>>, vector<1x128xf32>
    tpu.vector_store %arg8[%c0_17, %c0_18], %22 {strides = array<i32>} : memref<1x128xf32, #tpu.memory_space<vmem>>, vector<1x128xf32>,
    return
  }
  func.func @transform_0(%arg0: i32) -> (i32, i32) {
    %c0_i32 = arith.constant 0 : i32
    %c0_i32_0 = arith.constant 0 : i32
    return %c0_i32, %arg0 : i32, i32
  }
  func.func @transform_1(%arg0: i32) -> (i32, i32) {
    %c0_i32 = arith.constant 0 : i32
    %c0_i32_0 = arith.constant 0 : i32
    %c0_i32_1 = arith.constant 0 : i32
    return %c0_i32, %c0_i32_0 : i32, i32
  }
  func.func @transform_2(%arg0: i32) -> (i32, i32) {
    %c0_i32 = arith.constant 0 : i32
    %c0_i32_0 = arith.constant 0 : i32
    %c0_i32_1 = arith.constant 0 : i32
    return %c0_i32, %c0_i32_0 : i32, i32
  }
  func.func @transform_3(%arg0: i32) -> (i32, i32) {
    %c0_i32 = arith.constant 0 : i32
    %c0_i32_0 = arith.constant 0 : i32
    %c0_i32_1 = arith.constant 0 : i32
    return %c0_i32, %c0_i32_0 : i32, i32
  }
  func.func @transform_4(%arg0: i32) -> (i32, i32) {
    %c0_i32 = arith.constant 0 : i32
    %c0_i32_0 = arith.constant 0 : i32
    %c0_i32_1 = arith.constant 0 : i32
    return %c0_i32, %c0_i32_0 : i32, i32
  }
  func.func @transform_5(%arg0: i32) -> (i32, i32) {
    %c0_i32 = arith.constant 0 : i32
    %c0_i32_0 = arith.constant 0 : i32
    %c0_i32_1 = arith.constant 0 : i32
    return %c0_i32, %c0_i32_0 : i32, i32
  }
  func.func @transform_6(%arg0: i32) -> (i32, i32) {
    %c0_i32 = arith.constant 0 : i32
    %c0_i32_0 = arith.constant 0 : i32
    %c0_i32_1 = arith.constant 0 : i32
    return %c0_i32, %c0_i32_0 : i32, i32
  }
  func.func @transform_7(%arg0: i32) -> (i32, i32) {
    %c0_i32 = arith.constant 0 : i32
    %c0_i32_0 = arith.constant 0 : i32
    return %c0_i32, %arg0 : i32, i32
  }
}

</mosaic_0001>

<llo_original>
// kernel: tpu_custom_call.1
$region0: #{tpu_custom_call.1}
  #allocation0 [shape = 'u32[]', space=smem, size = 0x4, offset = 0x4, fixed_abs, tag = 'smem constant byte address 0x4 - core index']
  #allocation1 [shape = 'u32[72,128]{1,0:T(1,128)}', space=vmem, size = 0x9000, scoped, tag = 'internal scratch']
  #allocation2 [shape = 'f32[1,1]{1,0:T(1,128)S(1)}', space=vmem, size = 0x200, scoped, tag = 'scoped memory for tpu_custom_call.1']
  %s0 = inlined_call_operand.vmem [shape: f32[16,128], index: 0, kind: input, shape index: {}]
  %s1 = inlined_call_operand.vmem [shape: f32[32,16], index: 1, kind: input, shape index: {}]
  %s2 = inlined_call_operand.vmem [shape: f32[32,1], index: 2, kind: input, shape index: {}]
  %s3 = inlined_call_operand.vmem [shape: f32[32,32], index: 3, kind: input, shape index: {}]
  %s4 = inlined_call_operand.vmem [shape: f32[32,1], index: 4, kind: input, shape index: {}]
  %s5 = inlined_call_operand.vmem [shape: f32[32,1], index: 5, kind: input, shape index: {}]
  %s6 = inlined_call_operand.<no memory space> [shape: f32[1,1], index: 6, kind: input, shape index: {}]
  %s7 = inlined_call_operand.hbm [shape: f32[1,128], index: 7, kind: output, shape index: {}]
  %s8 = sld [smem:[#allocation0]]
  $region38: #{tpu_custom_call.1} parent=0
    _
  %s10 = ssub.s32 1, %s8
  %s11 = scalar_select 0, %s10, %s8
  %v12 = vstv %s6
  %13 = vst [vmem:[#allocation2] sm:$0x1] %v12
  $region1: #{tpu_custom_call.1} parent=0
    #allocation3 [shape = 'u8[512]{0}', space=vmem, size = 0x400, scoped, tag = 'output window, operand 0, single buffered']
    #allocation4 [shape = 's32[1]{0}', space=sflag, size = 0x4, scoped, tag = 'scoped memory for tpu_custom_call.1']
    %14 = vsyncpa [#allocation4], 0
    // Predicated region
    $region2: #{tpu_custom_call.1} parent=1 // pred_check
      _
    $region3: #{tpu_custom_call.1} parent=1 // pred_check_branch
      %16 = sbr.rel (0) target = $region5
    $region4: #{tpu_custom_call.1} parent=1 // pred_region
      _
    $region5: #{tpu_custom_call.1} parent=1 // pred_fallthru
      _
    // Predicated region
    $region6: #{tpu_custom_call.1} parent=1 // pred_check
      _
    $region7: #{tpu_custom_call.1} parent=1 // pred_check_branch
      %18 = sbr.rel (0) target = $region9
    $region8: #{tpu_custom_call.1} parent=1 // pred_region
      _
    $region9: #{tpu_custom_call.1} parent=1 // pred_fallthru
      _
    // Predicated region
    $region10: #{tpu_custom_call.1} parent=1 // pred_check
      _
    $region11: #{tpu_custom_call.1} parent=1 // pred_check_branch
      %20 = sbr.rel (0) target = $region13
    $region12: #{tpu_custom_call.1} parent=1 // pred_region
      _
    $region13: #{tpu_custom_call.1} parent=1 // pred_fallthru
      _
    // Predicated region
    $region14: #{tpu_custom_call.1} parent=1 // pred_check
      _
    $region15: #{tpu_custom_call.1} parent=1 // pred_check_branch
      %22 = sbr.rel (0) target = $region17
    $region16: #{tpu_custom_call.1} parent=1 // pred_region
      _
    $region17: #{tpu_custom_call.1} parent=1 // pred_fallthru
      _
    // Predicated region
    $region18: #{tpu_custom_call.1} parent=1 // pred_check
      _
    $region19: #{tpu_custom_call.1} parent=1 // pred_check_branch
      %24 = sbr.rel (0) target = $region21
    $region20: #{tpu_custom_call.1} parent=1 // pred_region
      _
    $region21: #{tpu_custom_call.1} parent=1 // pred_fallthru
      _
    // Predicated region
    $region22: #{tpu_custom_call.1} parent=1 // pred_check
      _
    $region23: #{tpu_custom_call.1} parent=1 // pred_check_branch
      %26 = sbr.rel (0) target = $region25
    $region24: #{tpu_custom_call.1} parent=1 // pred_region
      _
    $region25: #{tpu_custom_call.1} parent=1 // pred_fallthru
      _
    // Predicated region
    $region26: #{tpu_custom_call.1} parent=1 // pred_check
      _
    $region27: #{tpu_custom_call.1} parent=1 // pred_check_branch
      %28 = sbr.rel (0) target = $region29
    $region28: #{tpu_custom_call.1} parent=1 // pred_region
      _
    $region29: #{tpu_custom_call.1} parent=1 // pred_fallthru
      _
    %v29 = vld [vmem:[%s0] sm:$0xff]
    %v30 = vld [vmem:[%s0 + $0x8] sm:$0xff]
    %v31 = vld [vmem:[%s1] sm:$0xff]
    %v32 = vld [vmem:[%s1 + $0x8] sm:$0xff]
    %v33 = vld [vmem:[%s1 + $0x10] sm:$0xff]
    %v34 = vld [vmem:[%s1 + $0x18] sm:$0xff]
    %v35 = vld [vmem:[%s2] sm:$0xff]
    %v36 = vld [vmem:[%s2 + $0x8] sm:$0xff]
    %v37 = vld [vmem:[%s2 + $0x10] sm:$0xff]
    %v38 = vld [vmem:[%s2 + $0x18] sm:$0xff]
    %40 = vset.pattern.permute.xlu0 0
    %41 = vperm.xlu0 %40, %v35
    %v42 = vpop.permute.xlu0 %41
    %45 = vset.pattern.permute.xlu0 0
    %46 = vperm.xlu0 %45, %v36
    %v47 = vpop.permute.xlu0 %46
    %50 = vset.pattern.permute.xlu0 0
    %51 = vperm.xlu0 %50, %v37
    %v52 = vpop.permute.xlu0 %51
    %55 = vset.pattern.permute.xlu0 0
    %56 = vperm.xlu0 %55, %v38
    %v57 = vpop.permute.xlu0 %56
    %vm59 = vcmask 130048
    %v61 = vsel %vm59, %v31, 0
    %v64 = vsel %vm59, %v32, 0
    %v67 = vsel %vm59, %v33, 0
    %v70 = vsel %vm59, %v34, 0
    %72 = vmatpush.msra.mxu0 0.0
    %73 = vmatpush.msra.mxu0 0.0
    %74 = vmatpush.msra.mxu0 0.0
    %75 = vmatpush.msra.mxu0 0.0
    %76 = vmatpush.msra.mxu0 0.0
    %77 = vmatpush.msra.mxu0 0.0
    %78 = vmatpush.msra.mxu0 0.0
    %79 = vmatpush.msra.mxu0 0.0
    %80 = vmatpush.msra.mxu0 0.0
    %81 = vmatpush.msra.mxu0 0.0
    %82 = vmatpush.msra.mxu0 0.0
    %83 = vmatpush.msra.mxu0 0.0
    %84 = vmatpush.msra.mxu0 0.0
    %85 = vmatpush.msra.mxu0 0.0
    %86 = vmatpush.msra.mxu0 %v30
    %87 = vmatpush.msra.mxu0 %v29
    %88 = vmatmul.f32.gmra.mxu0 %v61
    %v89 = vpop.f32.mrf.mxu0
    %v90 = vadd.f32 %v42, %v89
    %91 = vmatmul.f32.gmra.mxu0 %v64
    %v92 = vpop.f32.mrf.mxu0
    %v93 = vadd.f32 %v47, %v92
    %94 = vmatmul.f32.gmra.mxu0 %v67
    %v95 = vpop.f32.mrf.mxu0
    %v96 = vadd.f32 %v52, %v95
    %97 = vmatmul.f32.gmra.mxu0 %v70
    %v98 = vpop.f32.mrf.mxu0
    %v99 = vadd.f32 %v57, %v98
    %100 = vdwg.mxu0
    %v101 = vmax.f32 %v90, 0.0
    %v102 = vmax.f32 %v93, 0.0
    %v103 = vmax.f32 %v96, 0.0
    %v104 = vmax.f32 %v99, 0.0
    %v105 = vld [vmem:[%s3] sm:$0xff]
    %v106 = vld [vmem:[%s3 + $0x8] sm:$0xff]
    %v107 = vld [vmem:[%s3 + $0x10] sm:$0xff]
    %v108 = vld [vmem:[%s3 + $0x18] sm:$0xff]
    %v109 = vld [vmem:[%s4] sm:$0xff]
    %v110 = vld [vmem:[%s4 + $0x8] sm:$0xff]
    %v111 = vld [vmem:[%s4 + $0x10] sm:$0xff]
    %v112 = vld [vmem:[%s4 + $0x18] sm:$0xff]
    %114 = vset.pattern.permute.xlu0 0
    %115 = vperm.xlu0 %114, %v109
    %v116 = vpop.permute.xlu0 %115
    %119 = vset.pattern.permute.xlu0 0
    %120 = vperm.xlu0 %119, %v110
    %v121 = vpop.permute.xlu0 %120
    %124 = vset.pattern.permute.xlu0 0
    %125 = vperm.xlu0 %124, %v111
    %v126 = vpop.permute.xlu0 %125
    %129 = vset.pattern.permute.xlu0 0
    %130 = vperm.xlu0 %129, %v112
    %v131 = vpop.permute.xlu0 %130
    %vm133 = vcmask 261120
    %v135 = vsel %vm133, %v105, 0
    %v138 = vsel %vm133, %v106, 0
    %v141 = vsel %vm133, %v107, 0
    %v144 = vsel %vm133, %v108, 0
    %146 = vmatpush.msra.mxu0 0.0
    %147 = vmatpush.msra.mxu0 0.0
    %148 = vmatpush.msra.mxu0 0.0
    %149 = vmatpush.msra.mxu0 0.0
    %150 = vmatpush.msra.mxu0 0.0
    %151 = vmatpush.msra.mxu0 0.0
    %152 = vmatpush.msra.mxu0 0.0
    %153 = vmatpush.msra.mxu0 0.0
    %154 = vmatpush.msra.mxu0 0.0
    %155 = vmatpush.msra.mxu0 0.0
    %156 = vmatpush.msra.mxu0 0.0
    %157 = vmatpush.msra.mxu0 0.0
    %158 = vmatpush.msra.mxu0 %v104
    %159 = vmatpush.msra.mxu0 %v103
    %160 = vmatpush.msra.mxu0 %v102
    %161 = vmatpush.msra.mxu0 %v101
    %162 = vmatmul.f32.gmra.mxu0 %v135
    %v163 = vpop.f32.mrf.mxu0
    %v164 = vadd.f32 %v116, %v163
    %165 = vmatmul.f32.gmra.mxu0 %v138
    %v166 = vpop.f32.mrf.mxu0
    %v167 = vadd.f32 %v121, %v166
    %168 = vmatmul.f32.gmra.mxu0 %v141
    %v169 = vpop.f32.mrf.mxu0
    %v170 = vadd.f32 %v126, %v169
    %171 = vmatmul.f32.gmra.mxu0 %v144
    %v172 = vpop.f32.mrf.mxu0
    %v173 = vadd.f32 %v131, %v172
    %174 = vdwg.mxu0
    %v175 = vmax.f32 %v164, 0.0
    %v176 = vmax.f32 %v167, 0.0
    %v177 = vmax.f32 %v170, 0.0
    %v178 = vmax.f32 %v173, 0.0
    %v179 = vld [vmem:[%s5] sm:$0xff]
    %v180 = vld [vmem:[%s5 + $0x8] sm:$0xff]
    %v181 = vld [vmem:[%s5 + $0x10] sm:$0xff]
    %v182 = vld [vmem:[%s5 + $0x18] sm:$0xff]
    %184 = vset.pattern.permute.xlu0 0
    %185 = vperm.xlu0 %184, %v179
    %v186 = vpop.permute.xlu0 %185
    %189 = vset.pattern.permute.xlu0 0
    %190 = vperm.xlu0 %189, %v180
    %v191 = vpop.permute.xlu0 %190
    %194 = vset.pattern.permute.xlu0 0
    %195 = vperm.xlu0 %194, %v181
    %v196 = vpop.permute.xlu0 %195
    %199 = vset.pattern.permute.xlu0 0
    %200 = vperm.xlu0 %199, %v182
    %v201 = vpop.permute.xlu0 %200
    %v203 = vmul.f32 %v186, %v175
    %v204 = vmul.f32 %v191, %v176
    %v205 = vmul.f32 %v196, %v177
    %v206 = vmul.f32 %v201, %v178
    %v207 = vadd.f32 %v203, %v204
    %v208 = vadd.f32 %v207, %v205
    %v209 = vadd.f32 %v208, %v206
    %v210 = vrot.slane %v209, 4
    %v211 = vadd.f32 %v209, %v210
    %v212 = vrot.slane %v211, 2
    %v213 = vadd.f32 %v211, %v212
    %v214 = vrot.slane %v213, 1
    %v215 = vadd.f32 %v213, %v214
    %v216 = vld [vmem:[#allocation2] sm:$0x1]
    %218 = vset.pattern.permute.xlu0 0
    %219 = vperm.xlu0 %218, %v216
    %v220 = vpop.permute.xlu0 %219
    %v222 = vperm.slane %v220, 0
    %v223 = vadd.f32 %v215, %v222
    %224 = vst [vmem:[#allocation3] sm:$0x1] %v223
    // Predicated region
    $region30: #{tpu_custom_call.1} parent=1 // pred_check
      _
    $region31: #{tpu_custom_call.1} parent=1 // pred_check_branch
      %226 = sbr.rel (0) target = $region33
    $region32: #{tpu_custom_call.1} parent=1 // pred_region
      %228 = vsyncadd [#allocation4], 0
      %s230 = sshll.u32 [#allocation3], 4
      %s231 = int_to_ptr.vmem [resolvable:$true] %s230
      %s232 = sshll.u32 %s7, 4
      %s233 = int_to_ptr.hbm [resolvable:$true] %s232
      %235 = dma.vmem_to_hbm [thread:$0]  %s231, 16, %s233, [#allocation4]
    $region33: #{tpu_custom_call.1} parent=1 // pred_fallthru
      _
    // Predicated region
    $region34: #{tpu_custom_call.1} parent=1 // pred_check
      _
    $region35: #{tpu_custom_call.1} parent=1 // pred_check_branch
      %237 = sbr.rel (0) target = $region37
    $region36: #{tpu_custom_call.1} parent=1 // pred_region
      %239 = dma.done [#allocation4], 16
    $region37: #{tpu_custom_call.1} parent=1 // pred_fallthru
      _
    %240 = vsyncpa [#allocation4], 1

</llo_original>
